<compile_context>
chip_gen: v7x
topology: tpu7x:2x2x1
jax: 0.10.0
libtpu: 0.0.40
codegen_flags: <defaults>
</compile_context>

<pallas_src>
import functools

import jax
import jax.numpy as jnp
from jax.experimental import pallas as pl
from jax.experimental.pallas import tpu as pltpu


def _round_up(x, m):
    return ((x + m - 1) // m) * m


def _dense_mlp_kernel_single(x_ref, wg_ref, wu_ref, wd_ref, o_ref):
    """Whole intermediate dimension in one slab: no scratch accumulator."""
    x = x_ref[...]                                                       # (tm, H)
    gate = jnp.dot(x, wg_ref[...], preferred_element_type=jnp.float32)   # (tm, I)
    up = jnp.dot(x, wu_ref[...], preferred_element_type=jnp.float32)     # (tm, I)
    h = (gate * jax.nn.sigmoid(gate)) * up                               # SiluAndMul (f32)
    o_ref[...] = jnp.dot(h.astype(wd_ref.dtype), wd_ref[...],
                         preferred_element_type=jnp.float32).astype(o_ref.dtype)


def _dense_mlp_kernel_multi(x_ref, wg_ref, wu_ref, wd_ref, o_ref, acc_ref):
    """Grid = (m_tiles, i_tiles); i is a reduction with an f32 VMEM accumulator."""
    it = pl.program_id(1)

    x = x_ref[...]                                                       # (tm, H)
    gate = jnp.dot(x, wg_ref[...], preferred_element_type=jnp.float32)   # (tm, ti)
    up = jnp.dot(x, wu_ref[...], preferred_element_type=jnp.float32)     # (tm, ti)
    h = (gate * jax.nn.sigmoid(gate)) * up                               # SiluAndMul (f32)
    partial = jnp.dot(h.astype(wd_ref.dtype), wd_ref[...],
                      preferred_element_type=jnp.float32)                # (tm, H)

    # First slab writes the accumulator directly (saves a zero-init + RMW pass).
    @pl.when(it == 0)
    def _init():
        acc_ref[...] = partial

    @pl.when(it > 0)
    def _accum():
        acc_ref[...] += partial

    @pl.when(it == pl.num_programs(1) - 1)
    def _finalize():
        o_ref[...] = acc_ref[...].astype(o_ref.dtype)


@functools.partial(jax.jit, static_argnames=("block_m", "block_i"))
def dense_mlp(x, w_gate_up, w_down, *, block_m=1024, block_i=1024):
    """x: (T, H), w_gate_up: (H, 2*I) merged [gate|up], w_down: (I, H) -> (T, H)."""
    T, H = x.shape
    two_I = w_gate_up.shape[1]
    I = two_I // 2
    assert w_gate_up.shape == (H, two_I)
    assert w_down.shape == (I, H)
    assert I % 128 == 0, "intermediate_size must be a multiple of 128"

    x_bpe = x.dtype.itemsize
    w_bpe = w_gate_up.dtype.itemsize

    # dtype-aware sublane alignment for the token (row) axis.
    row_align = {4: 8, 2: 16, 1: 32}.get(x_bpe, 8)

    # ---- VMEM budget, clamped to physical capacity (v7x = 64 MiB per TC) ----
    try:
        vmem_cap = int(getattr(pltpu.get_tpu_info(), "vmem_capacity_bytes", 0)) or (64 << 20)
    except Exception:
        vmem_cap = 64 << 20  # conservative fallback: correct on all generations
    tile_budget = int(vmem_cap * 0.75)

    # ---- tile sizes ----------------------------------------------------------
    # Token tile: as large as VMEM allows (weights are re-streamed per m tile).
    tm = min(block_m, _round_up(T, row_align))

    # Intermediate tile: largest lane-aligned divisor of I that is <= block_i.
    ti_choices = sorted((d for d in range(128, I + 1, 128) if I % d == 0),
                        reverse=True)
    ti = next((t for t in ti_choices if t <= max(block_i, 128)), ti_choices[-1])

    def vmem_est(tm_, ti_):
        # double-buffered input/output tiles + resident f32 accumulator
        return (2 * (tm_ * H * x_bpe          # x tile
                     + 2 * H * ti_ * w_bpe    # gate + up column slabs
                     + ti_ * H * w_bpe        # down-proj row slab
                     + tm_ * H * x_bpe)       # output tile
                + tm_ * H * 4)                # f32 accumulator

    # Shrink until it fits the per-generation budget, preferring to keep tm big.
    while vmem_est(tm, ti) > tile_budget:
        smaller_ti = next((t for t in ti_choices if t < ti), None)
        if smaller_ti is not None and ti > 512:
            ti = smaller_ti
        elif tm > 256:
            tm = _round_up(tm // 2, row_align)
        elif smaller_ti is not None:
            ti = smaller_ti
        elif tm > row_align:
            tm = _round_up(tm // 2, row_align)
        else:
            break

    # Balance token tiles so the last tile isn't mostly padding.
    num_m = pl.cdiv(T, tm)
    tm = _round_up(pl.cdiv(T, num_m), row_align)
    T_pad = num_m * tm
    if T_pad != T:
        x = jnp.pad(x, ((0, T_pad - T), (0, 0)))

    num_i = I // ti

    # ---- advisory cost estimate (actual traffic: weights streamed per m) ----
    flops = 2 * T_pad * H * two_I + 2 * T_pad * I * H
    wgu_bytes = w_gate_up.size * w_bpe
    wd_bytes = w_down.size * w_bpe
    cost = pl.CostEstimate(
        flops=flops,
        transcendentals=T_pad * I,
        bytes_accessed=(T_pad * H * x_bpe                 # x, streamed once
                        + num_m * (wgu_bytes + wd_bytes)  # weights, per m tile
                        + T_pad * H * x_bpe))             # output

    vmem_limit = int(min(vmem_est(tm, ti) + (8 << 20), int(vmem_cap * 0.85)))

    out_shape = jax.ShapeDtypeStruct((T_pad, H), x.dtype)

    if num_i == 1:
        # Single intermediate slab: no reduction axis, no f32 accumulator.
        out = pl.pallas_call(
            _dense_mlp_kernel_single,
            out_shape=out_shape,
            grid_spec=pltpu.PrefetchScalarGridSpec(
                num_scalar_prefetch=0,
                grid=(num_m,),
                in_specs=[
                    pl.BlockSpec((tm, H), lambda m: (m, 0)),    # x tile
                    pl.BlockSpec((H, ti), lambda m: (0, 0)),    # gate columns
                    pl.BlockSpec((H, ti), lambda m: (0, 1)),    # up columns
                    pl.BlockSpec((ti, H), lambda m: (0, 0)),    # down rows
                ],
                out_specs=pl.BlockSpec((tm, H), lambda m: (m, 0)),
            ),
            compiler_params=pltpu.CompilerParams(
                dimension_semantics=("parallel",),
                vmem_limit_bytes=vmem_limit,
            ),
            cost_estimate=cost,
        )(x, w_gate_up, w_gate_up, w_down)
    else:
        out = pl.pallas_call(
            _dense_mlp_kernel_multi,
            out_shape=out_shape,
            grid_spec=pltpu.PrefetchScalarGridSpec(
                num_scalar_prefetch=0,
                grid=(num_m, num_i),
                in_specs=[
                    # x tile: block index constant across i -> fetched once per m.
                    pl.BlockSpec((tm, H), lambda m, i: (m, 0)),
                    # gate columns of the merged weight: cols [i*ti, (i+1)*ti).
                    pl.BlockSpec((H, ti), lambda m, i: (0, i)),
                    # up columns of the same merged weight: cols [I + i*ti, ...).
                    pl.BlockSpec((H, ti), lambda m, i: (0, i + num_i)),
                    # down-proj rows for this I slab.
                    pl.BlockSpec((ti, H), lambda m, i: (i, 0)),
                ],
                out_specs=pl.BlockSpec((tm, H), lambda m, i: (m, 0)),
                scratch_shapes=[pltpu.VMEM((tm, H), jnp.float32)],
            ),
            compiler_params=pltpu.CompilerParams(
                dimension_semantics=("parallel", "arbitrary"),
                vmem_limit_bytes=vmem_limit,
            ),
            cost_estimate=cost,
        )(x, w_gate_up, w_gate_up, w_down)

    return out[:T] if T_pad != T else out


def dense_mlp_reference(x, w_gate_up, w_down):
    I = w_gate_up.shape[1] // 2
    h = x @ w_gate_up
    gate, up = h[:, :I], h[:, I:]
    h = jax.nn.silu(gate) * up
    return h @ w_down


if __name__ == "__main__":
    key = jax.random.PRNGKey(0)

    # --- Test 1: single-slab fast path (hidden=32, intermediate=128) --------
    tokens, hidden_size, intermediate_size = 16, 32, 128
    k1, k2, k3, key = jax.random.split(key, 4)
    x = jax.random.normal(k1, (tokens, hidden_size), dtype=jnp.float32)
    w_gate_up = jax.random.normal(
        k2, (hidden_size, 2 * intermediate_size), dtype=jnp.float32) * 0.05
    w_down = jax.random.normal(
        k3, (intermediate_size, hidden_size), dtype=jnp.float32) * 0.05

    out = jax.block_until_ready(dense_mlp(x, w_gate_up, w_down))
    ref = dense_mlp_reference(x, w_gate_up, w_down)
    assert out.shape == (tokens, hidden_size)
    err1 = jnp.max(jnp.abs(out - ref))
    assert jnp.allclose(out, ref, atol=1e-3, rtol=1e-3), f"max abs err = {err1}"

    # --- Test 2: multi-slab reduction path + ragged token count -------------
    tokens2, hidden_size2, intermediate_size2 = 20, 32, 256
    k1, k2, k3, key = jax.random.split(key, 4)
    x2 = jax.random.normal(k1, (tokens2, hidden_size2), dtype=jnp.float32)
    w_gate_up2 = jax.random.normal(
        k2, (hidden_size2, 2 * intermediate_size2), dtype=jnp.float32) * 0.05
    w_down2 = jax.random.normal(
        k3, (intermediate_size2, hidden_size2), dtype=jnp.float32) * 0.05

    out2 = jax.block_until_ready(
        dense_mlp(x2, w_gate_up2, w_down2, block_i=128))  # forces 2 i-steps
    ref2 = dense_mlp_reference(x2, w_gate_up2, w_down2)
    assert out2.shape == (tokens2, hidden_size2)
    err2 = jnp.max(jnp.abs(out2 - ref2))
    assert jnp.allclose(out2, ref2, atol=1e-3, rtol=1e-3), f"max abs err = {err2}"

    print("KERNEL_OK")
</pallas_src>

<mosaic_0001>
module attributes {stable_mosaic.version = 11 : i64} {
  func.func @_dense_mlp_kernel_single(%arg0: i32, %arg1: memref<16x32xf32, #tpu.memory_space<vmem>>, %arg2: memref<32x128xf32, #tpu.memory_space<vmem>>, %arg3: memref<32x128xf32, #tpu.memory_space<vmem>>, %arg4: memref<128x32xf32, #tpu.memory_space<vmem>>, %arg5: memref<16x32xf32, #tpu.memory_space<vmem>>) attributes {dimension_semantics = [#tpu.dimension_semantics<parallel>], iteration_bounds = array<i64: 1>, scalar_prefetch = 0 : i64, scratch_operands = 0 : i64, tpu.core_type = #tpu.core_type<tc>, window_params = [{transform_indices = @transform_0, window_bounds = array<i64: 16, 32>}, {transform_indices = @transform_1, window_bounds = array<i64: 32, 128>}, {transform_indices = @transform_2, window_bounds = array<i64: 32, 128>}, {pipeline_mode = #tpu.pipeline_mode<synchronous>, transform_indices = @transform_3, window_bounds = array<i64: 128, 32>}, {transform_indices = @transform_4, window_bounds = array<i64: 16, 32>}]} {
    %c0 = arith.constant 0 : index
    %c0_0 = arith.constant 0 : index
    %0 = vector.load %arg1[%c0, %c0_0] : memref<16x32xf32, #tpu.memory_space<vmem>>, vector<16x32xf32>
    %c0_1 = arith.constant 0 : index
    %c0_2 = arith.constant 0 : index
    %1 = vector.load %arg2[%c0_1, %c0_2] : memref<32x128xf32, #tpu.memory_space<vmem>>, vector<32x128xf32>
    %cst = arith.constant dense<0.000000e+00> : vector<16x128xf32>
    %2 = tpu.matmul %0, %1, %cst {dimension_numbers = #tpu.dot_dimension_numbers<[1], [0], [0], [1], [0, 0, 1, 1], [], []>} : vector<16x32xf32>, vector<32x128xf32>, vector<16x128xf32> -> vector<16x128xf32>
    %c0_3 = arith.constant 0 : index
    %c0_4 = arith.constant 0 : index
    %3 = vector.load %arg3[%c0_3, %c0_4] : memref<32x128xf32, #tpu.memory_space<vmem>>, vector<32x128xf32>
    %cst_5 = arith.constant dense<0.000000e+00> : vector<16x128xf32>
    %4 = tpu.matmul %0, %3, %cst_5 {dimension_numbers = #tpu.dot_dimension_numbers<[1], [0], [0], [1], [0, 0, 1, 1], [], []>} : vector<16x32xf32>, vector<32x128xf32>, vector<16x128xf32> -> vector<16x128xf32>
    %5 = arith.negf %2 : vector<16x128xf32>
    %6 = math.exp %5 : vector<16x128xf32>
    %cst_6 = arith.constant 1.000000e+00 : f32
    %7 = vector.broadcast %cst_6 : f32 to vector<16x128xf32>
    %8 = arith.addf %7, %6 : vector<16x128xf32>
    %9 = arith.divf %7, %8 : vector<16x128xf32>
    %10 = arith.mulf %2, %9 : vector<16x128xf32>
    %11 = arith.mulf %10, %4 : vector<16x128xf32>
    %c0_7 = arith.constant 0 : index
    %c0_8 = arith.constant 0 : index
    %12 = vector.load %arg4[%c0_7, %c0_8] : memref<128x32xf32, #tpu.memory_space<vmem>>, vector<128x32xf32>
    %cst_9 = arith.constant dense<0.000000e+00> : vector<16x32xf32>
    %13 = tpu.matmul %11, %12, %cst_9 {dimension_numbers = #tpu.dot_dimension_numbers<[1], [0], [0], [1], [0, 0, 1, 1], [], []>} : vector<16x128xf32>, vector<128x32xf32>, vector<16x32xf32> -> vector<16x32xf32>
    %c0_10 = arith.constant 0 : index
    %c0_11 = arith.constant 0 : index
    %14 = vector.load %arg5[%c0_10, %c0_11] : memref<16x32xf32, #tpu.memory_space<vmem>>, vector<16x32xf32>
    tpu.vector_store %arg5[%c0_10, %c0_11], %13 {strides = array<i32>} : memref<16x32xf32, #tpu.memory_space<vmem>>, vector<16x32xf32>,
    return
  }
  func.func @transform_0(%arg0: i32) -> (i32, i32) {
    %c0_i32 = arith.constant 0 : i32
    %c0_i32_0 = arith.constant 0 : i32
    return %arg0, %c0_i32 : i32, i32
  }
  func.func @transform_1(%arg0: i32) -> (i32, i32) {
    %c0_i32 = arith.constant 0 : i32
    %c0_i32_0 = arith.constant 0 : i32
    %c0_i32_1 = arith.constant 0 : i32
    return %c0_i32, %c0_i32_0 : i32, i32
  }
  func.func @transform_2(%arg0: i32) -> (i32, i32) {
    %c0_i32 = arith.constant 0 : i32
    %c1_i32 = arith.constant 1 : i32
    %c0_i32_0 = arith.constant 0 : i32
    return %c0_i32, %c1_i32 : i32, i32
  }
  func.func @transform_3(%arg0: i32) -> (i32, i32) {
    %c0_i32 = arith.constant 0 : i32
    %c0_i32_0 = arith.constant 0 : i32
    %c0_i32_1 = arith.constant 0 : i32
    return %c0_i32, %c0_i32_0 : i32, i32
  }
  func.func @transform_4(%arg0: i32) -> (i32, i32) {
    %c0_i32 = arith.constant 0 : i32
    %c0_i32_0 = arith.constant 0 : i32
    return %arg0, %c0_i32 : i32, i32
  }
}

</mosaic_0001>

<llo_original>
// kernel: dense_mlp.1
$region0: #{dense_mlp.1}
  #allocation0 [shape = 'u32[]', space=smem, size = 0x4, offset = 0x4, fixed_abs, tag = 'smem constant byte address 0x4 - core index']
  #allocation1 [shape = 'u32[144,128]{1,0:T(1,128)}', space=vmem, size = 0x12000, scoped, tag = 'internal scratch']
  %s0 = inlined_call_operand.vmem [shape: f32[16,32], index: 0, kind: input, shape index: {}]
  %s1 = inlined_call_operand.vmem [shape: f32[32,256], index: 1, kind: input, shape index: {}, may-alias: {1,2}]
  %s2 = inlined_call_operand.vmem [shape: f32[32,256], index: 2, kind: input, shape index: {}, may-alias: {1,2}]
  %s3 = inlined_call_operand.vmem [shape: f32[128,32], index: 3, kind: input, shape index: {}]
  %s4 = inlined_call_operand.hbm [shape: f32[16,32], index: 4, kind: output, shape index: {}]
  %s5 = sld [smem:[#allocation0]]
  $region102: #{dense_mlp.1} parent=0
    _
  %s7 = ssub.s32 1, %s5
  %s8 = scalar_select 0, %s7, %s5
  $region1: #{dense_mlp.1} parent=0
    #allocation2 [shape = 'u8[16384]{0}', space=vmem, size = 0x4000, scoped, tag = 'input window, operand 1, single buffered']
    #allocation3 [shape = 'u8[16384]{0}', space=vmem, size = 0x4000, scoped, tag = 'input window, operand 2, single buffered']
    #allocation4 [shape = 'u8[8192]{0}', space=vmem, size = 0x2000, scoped, tag = 'output window, operand 0, single buffered']
    #allocation5 [shape = 's32[1]{0}', space=sflag, size = 0x4, scoped, tag = 'scoped memory for dense_mlp.1']
    %9 = vsyncpa [#allocation5], 0
    // Predicated region
    $region2: #{dense_mlp.1} parent=1 // pred_check
      _
    $region3: #{dense_mlp.1} parent=1 // pred_check_branch
      %11 = sbr.rel (0) target = $region5
    $region4: #{dense_mlp.1} parent=1 // pred_region
      _
    $region5: #{dense_mlp.1} parent=1 // pred_fallthru
      _
    // Predicated region
    $region6: #{dense_mlp.1} parent=1 // pred_check
      _
    $region7: #{dense_mlp.1} parent=1 // pred_check_branch
      %13 = sbr.rel (0) target = $region9
    $region8: #{dense_mlp.1} parent=1 // pred_region
      // Predicated region
      $region10: #{dense_mlp.1} parent=8 // pred_check
        _
      $region11: #{dense_mlp.1} parent=8 // pred_check_branch
        %15 = sbr.rel (0) target = $region13
      $region12: #{dense_mlp.1} parent=8 // pred_region
        // Predicated region
        $region14: #{dense_mlp.1} parent=12 // pred_check
          _
        $region15: #{dense_mlp.1} parent=12 // pred_check_branch
          %17 = sbr.rel (0) target = $region17
        $region16: #{dense_mlp.1} parent=12 // pred_region
          // Predicated region
          $region29: #{dense_mlp.1} parent=16 // pred_check
            _
          $region30: #{dense_mlp.1} parent=16 // pred_check_branch
            %38 = sbr.rel (0) target = $region32
          $region31: #{dense_mlp.1} parent=16 // pred_region
            loop: start=0, step=1, limit=1
            $region33: #{dense_mlp.1} parent=31 // loop_pre_header
              _
            $region34: #{dense_mlp.1} parent=31 // loop_header
              %s40 = sphi 0, %s44
              %p41 = scmp.ge.s32.totalorder %s40, 1
              %s45 = sphi %s1, %s1
              %s46 = sphi [#allocation2], [#allocation2]
            $region35: #{dense_mlp.1} parent=31 // loop_header_branch
              %43 = sbr.rel (%p41) target = $region39
            $region36: #{dense_mlp.1} parent=31 // loop_body
              %v47 = vld [vmem:[%s45] sm:$0xff]
              %48 = vst [vmem:[%s46] sm:$0xff] %v47
              %v49 = vld [vmem:[%s45 + $0x10] sm:$0xff]
              %50 = vst [vmem:[%s46 + $0x8] sm:$0xff] %v49
              %v51 = vld [vmem:[%s45 + $0x20] sm:$0xff]
              %52 = vst [vmem:[%s46 + $0x10] sm:$0xff] %v51
              %v53 = vld [vmem:[%s45 + $0x30] sm:$0xff]
              %54 = vst [vmem:[%s46 + $0x18] sm:$0xff] %v53
            $region37: #{dense_mlp.1} parent=31 // loop_footer
              %s44 = sadd.s32 1, %s40
            $region38: #{dense_mlp.1} parent=31 // loop_footer_branch
              %39 = sbr.rel target = $region34
            $region39: #{dense_mlp.1} parent=31 // loop_exit
              _
          $region32: #{dense_mlp.1} parent=16 // pred_fallthru
            _
          // Predicated region
          $region40: #{dense_mlp.1} parent=16 // pred_check
            _
          $region41: #{dense_mlp.1} parent=16 // pred_check_branch
            %56 = sbr.rel target = $region43
          $region42: #{dense_mlp.1} parent=16 // pred_region
            _
          $region43: #{dense_mlp.1} parent=16 // pred_fallthru
            _
        $region17: #{dense_mlp.1} parent=12 // pred_fallthru
          _
        // Predicated region
        $region18: #{dense_mlp.1} parent=12 // pred_check
          _
        $region19: #{dense_mlp.1} parent=12 // pred_check_branch
          %19 = sbr.rel target = $region21
        $region20: #{dense_mlp.1} parent=12 // pred_region
          loop: start=0, step=1, limit=1
          $region22: #{dense_mlp.1} parent=20 // loop_pre_header
            _
          $region23: #{dense_mlp.1} parent=20 // loop_header
            %s22 = sphi 0, %s26
            %p23 = scmp.ge.s32.totalorder %s22, 1
            %s27 = sphi %s1, %s1
            %s28 = sphi [#allocation2], [#allocation2]
          $region24: #{dense_mlp.1} parent=20 // loop_header_branch
            %25 = sbr.rel (%p23) target = $region28
          $region25: #{dense_mlp.1} parent=20 // loop_body
            %v29 = vld [vmem:[%s27] sm:$0xff]
            %30 = vst [vmem:[%s28] sm:$0xff] %v29
            %v31 = vld [vmem:[%s27 + $0x10] sm:$0xff]
            %32 = vst [vmem:[%s28 + $0x8] sm:$0xff] %v31
            %v33 = vld [vmem:[%s27 + $0x20] sm:$0xff]
            %34 = vst [vmem:[%s28 + $0x10] sm:$0xff] %v33
            %v35 = vld [vmem:[%s27 + $0x30] sm:$0xff]
            %36 = vst [vmem:[%s28 + $0x18] sm:$0xff] %v35
          $region26: #{dense_mlp.1} parent=20 // loop_footer
            %s26 = sadd.s32 1, %s22
          $region27: #{dense_mlp.1} parent=20 // loop_footer_branch
            %21 = sbr.rel target = $region23
          $region28: #{dense_mlp.1} parent=20 // loop_exit
            _
        $region21: #{dense_mlp.1} parent=12 // pred_fallthru
          _
      $region13: #{dense_mlp.1} parent=8 // pred_fallthru
        _
      %57 = vnop
    $region9: #{dense_mlp.1} parent=1 // pred_fallthru
      _
    // Predicated region
    $region44: #{dense_mlp.1} parent=1 // pred_check
      _
    $region45: #{dense_mlp.1} parent=1 // pred_check_branch
      %59 = sbr.rel (0) target = $region47
    $region46: #{dense_mlp.1} parent=1 // pred_region
      %s60 = scalar_lea.vmem %s2, 8
      // Predicated region
      $region48: #{dense_mlp.1} parent=46 // pred_check
        _
      $region49: #{dense_mlp.1} parent=46 // pred_check_branch
        %62 = sbr.rel (0) target = $region51
      $region50: #{dense_mlp.1} parent=46 // pred_region
        // Predicated region
        $region52: #{dense_mlp.1} parent=50 // pred_check
          _
        $region53: #{dense_mlp.1} parent=50 // pred_check_branch
          %64 = sbr.rel (0) target = $region55
        $region54: #{dense_mlp.1} parent=50 // pred_region
          // Predicated region
          $region67: #{dense_mlp.1} parent=54 // pred_check
            _
          $region68: #{dense_mlp.1} parent=54 // pred_check_branch
            %85 = sbr.rel (0) target = $region70
          $region69: #{dense_mlp.1} parent=54 // pred_region
            loop: start=0, step=1, limit=1
            $region71: #{dense_mlp.1} parent=69 // loop_pre_header
              _
            $region72: #{dense_mlp.1} parent=69 // loop_header
              %s87 = sphi 0, %s91
              %p88 = scmp.ge.s32.totalorder %s87, 1
              %s92 = sphi %s60, %s60
              %s93 = sphi [#allocation3], [#allocation3]
            $region73: #{dense_mlp.1} parent=69 // loop_header_branch
              %90 = sbr.rel (%p88) target = $region77
            $region74: #{dense_mlp.1} parent=69 // loop_body
              %v94 = vld [vmem:[%s92] sm:$0xff]
              %95 = vst [vmem:[%s93] sm:$0xff] %v94
              %v96 = vld [vmem:[%s92 + $0x10] sm:$0xff]
              %97 = vst [vmem:[%s93 + $0x8] sm:$0xff] %v96
              %v98 = vld [vmem:[%s92 + $0x20] sm:$0xff]
              %99 = vst [vmem:[%s93 + $0x10] sm:$0xff] %v98
              %v100 = vld [vmem:[%s92 + $0x30] sm:$0xff]
              %101 = vst [vmem:[%s93 + $0x18] sm:$0xff] %v100
            $region75: #{dense_mlp.1} parent=69 // loop_footer
              %s91 = sadd.s32 1, %s87
            $region76: #{dense_mlp.1} parent=69 // loop_footer_branch
              %86 = sbr.rel target = $region72
            $region77: #{dense_mlp.1} parent=69 // loop_exit
              _
          $region70: #{dense_mlp.1} parent=54 // pred_fallthru
            _
          // Predicated region
          $region78: #{dense_mlp.1} parent=54 // pred_check
            _
          $region79: #{dense_mlp.1} parent=54 // pred_check_branch
            %103 = sbr.rel target = $region81
          $region80: #{dense_mlp.1} parent=54 // pred_region
            _
          $region81: #{dense_mlp.1} parent=54 // pred_fallthru
            _
        $region55: #{dense_mlp.1} parent=50 // pred_fallthru
          _
        // Predicated region
        $region56: #{dense_mlp.1} parent=50 // pred_check
          _
        $region57: #{dense_mlp.1} parent=50 // pred_check_branch
          %66 = sbr.rel target = $region59
        $region58: #{dense_mlp.1} parent=50 // pred_region
          loop: start=0, step=1, limit=1
          $region60: #{dense_mlp.1} parent=58 // loop_pre_header
            _
          $region61: #{dense_mlp.1} parent=58 // loop_header
            %s69 = sphi 0, %s73
            %p70 = scmp.ge.s32.totalorder %s69, 1
            %s74 = sphi %s60, %s60
            %s75 = sphi [#allocation3], [#allocation3]
          $region62: #{dense_mlp.1} parent=58 // loop_header_branch
            %72 = sbr.rel (%p70) target = $region66
          $region63: #{dense_mlp.1} parent=58 // loop_body
            %v76 = vld [vmem:[%s74] sm:$0xff]
            %77 = vst [vmem:[%s75] sm:$0xff] %v76
            %v78 = vld [vmem:[%s74 + $0x10] sm:$0xff]
            %79 = vst [vmem:[%s75 + $0x8] sm:$0xff] %v78
            %v80 = vld [vmem:[%s74 + $0x20] sm:$0xff]
            %81 = vst [vmem:[%s75 + $0x10] sm:$0xff] %v80
            %v82 = vld [vmem:[%s74 + $0x30] sm:$0xff]
            %83 = vst [vmem:[%s75 + $0x18] sm:$0xff] %v82
          $region64: #{dense_mlp.1} parent=58 // loop_footer
            %s73 = sadd.s32 1, %s69
          $region65: #{dense_mlp.1} parent=58 // loop_footer_branch
            %68 = sbr.rel target = $region61
          $region66: #{dense_mlp.1} parent=58 // loop_exit
            _
        $region59: #{dense_mlp.1} parent=50 // pred_fallthru
          _
      $region51: #{dense_mlp.1} parent=46 // pred_fallthru
        _
      %104 = vnop
    $region47: #{dense_mlp.1} parent=1 // pred_fallthru
      _
    // Predicated region
    $region82: #{dense_mlp.1} parent=1 // pred_check
      _
    $region83: #{dense_mlp.1} parent=1 // pred_check_branch
      %106 = sbr.rel (0) target = $region85
    $region84: #{dense_mlp.1} parent=1 // pred_region
      _
    $region85: #{dense_mlp.1} parent=1 // pred_fallthru
      _
    // Predicated region
    $region86: #{dense_mlp.1} parent=1 // pred_check
      _
    $region87: #{dense_mlp.1} parent=1 // pred_check_branch
      %108 = sbr.rel (0) target = $region89
    $region88: #{dense_mlp.1} parent=1 // pred_region
      _
    $region89: #{dense_mlp.1} parent=1 // pred_fallthru
      _
    // Predicated region
    $region90: #{dense_mlp.1} parent=1 // pred_check
      _
    $region91: #{dense_mlp.1} parent=1 // pred_check_branch
      %110 = sbr.rel (0) target = $region93
    $region92: #{dense_mlp.1} parent=1 // pred_region
      _
    $region93: #{dense_mlp.1} parent=1 // pred_fallthru
      _
    %v111 = vld [vmem:[%s0] sm:$0xff]
    %v112 = vld [vmem:[%s0 + $0x8] sm:$0xff]
    %v113 = vld [vmem:[#allocation2] sm:$0xff]
    %v114 = vld [vmem:[#allocation2 + $0x8] sm:$0xff]
    %v115 = vld [vmem:[#allocation2 + $0x10] sm:$0xff]
    %v116 = vld [vmem:[#allocation2 + $0x18] sm:$0xff]
    %vm117 = vcmask 261120
    %v119 = vsel %vm117, %v111, 0
    %v122 = vsel %vm117, %v112, 0
    %124 = vmatprep.subr.mxu0 0.0
    %125 = vmatpush1.msra.mxu0 %v113
    %126 = vmatprep.subr.mxu0 0.0
    %127 = vmatpush1.msra.mxu0 %v114
    %128 = vmatprep.subr.mxu0 0.0
    %129 = vmatpush1.msra.mxu0 %v115
    %130 = vmatprep.subr.mxu0 0.0
    %131 = vmatpush1.msra.mxu0 %v116
    %132 = vmatprep.subr.mxu0 0.0
    %133 = vmatpush1.msra.mxu0 0.0
    %134 = vmatprep.subr.mxu0 0.0
    %135 = vmatpush1.msra.mxu0 0.0
    %136 = vmatprep.subr.mxu0 0.0
    %137 = vmatpush1.msra.mxu0 0.0
    %138 = vmatprep.subr.mxu0 0.0
    %139 = vmatpush1.msra.mxu0 0.0
    %140 = vmatprep.subr.mxu0 0.0
    %141 = vmatpush1.msra.mxu0 0.0
    %142 = vmatprep.subr.mxu0 0.0
    %143 = vmatpush1.msra.mxu0 0.0
    %144 = vmatprep.subr.mxu0 0.0
    %145 = vmatpush1.msra.mxu0 0.0
    %146 = vmatprep.subr.mxu0 0.0
    %147 = vmatpush1.msra.mxu0 0.0
    %148 = vmatprep.subr.mxu0 0.0
    %149 = vmatpush1.msra.mxu0 0.0
    %150 = vmatprep.subr.mxu0 0.0
    %151 = vmatpush1.msra.mxu0 0.0
    %152 = vmatprep.subr.mxu0 0.0
    %153 = vmatpush1.msra.mxu0 0.0
    %154 = vmatprep.subr.mxu0 0.0
    %155 = vmatpush1.msra.mxu0 0.0
    %156 = vmatprep.subr.mxu0 0.0
    %157 = vmatpush1.msra.mxu0 0.0
    %158 = vmatprep.subr.mxu0 0.0
    %159 = vmatpush1.msra.mxu0 0.0
    %160 = vmatprep.subr.mxu0 0.0
    %161 = vmatpush1.msra.mxu0 0.0
    %162 = vmatprep.subr.mxu0 0.0
    %163 = vmatpush1.msra.mxu0 0.0
    %164 = vmatprep.subr.mxu0 0.0
    %165 = vmatpush1.msra.mxu0 0.0
    %166 = vmatprep.subr.mxu0 0.0
    %167 = vmatpush1.msra.mxu0 0.0
    %168 = vmatprep.subr.mxu0 0.0
    %169 = vmatpush1.msra.mxu0 0.0
    %170 = vmatprep.subr.mxu0 0.0
    %171 = vmatpush1.msra.mxu0 0.0
    %172 = vmatprep.subr.mxu0 0.0
    %173 = vmatpush1.msra.mxu0 0.0
    %174 = vmatprep.subr.mxu0 0.0
    %175 = vmatpush1.msra.mxu0 0.0
    %176 = vmatprep.subr.mxu0 0.0
    %177 = vmatpush1.msra.mxu0 0.0
    %178 = vmatprep.subr.mxu0 0.0
    %179 = vmatpush1.msra.mxu0 0.0
    %180 = vmatprep.subr.mxu0 0.0
    %181 = vmatpush1.msra.mxu0 0.0
    %182 = vmatprep.subr.mxu0 0.0
    %183 = vmatpush1.msra.mxu0 0.0
    %184 = vmatprep.subr.mxu0 0.0
    %185 = vmatpush1.msra.mxu0 0.0
    %186 = vmatprep.subr.mxu0 0.0
    %187 = vmatpush1.msra.mxu0 0.0
    %188 = vmatprep.mubr.f32.mxu0 0.0
    %189 = vmatmul.mubr.f32.gmra.mrb[0].mxu0 %v119
    %v190 = vpop.f32.mrb[0].mxu0
    %v191 = vadd.f32 0.0, %v190
    %v192 = vpop.f32.mrb[0].mxu0
    %193 = vmatprep.mubr.f32.mxu0 0.0
    %194 = vmatmul.mubr.f32.gmra.mrb[0].mxu0 %v122
    %v195 = vpop.f32.mrb[0].mxu0
    %v196 = vadd.f32 0.0, %v195
    %v197 = vpop.f32.mrb[0].mxu0
    %198 = vdwg.mxu0
    %v199 = vld [vmem:[#allocation3] sm:$0xff]
    %v200 = vld [vmem:[#allocation3 + $0x8] sm:$0xff]
    %v201 = vld [vmem:[#allocation3 + $0x10] sm:$0xff]
    %v202 = vld [vmem:[#allocation3 + $0x18] sm:$0xff]
    %203 = vmatprep.subr.mxu0 0.0
    %204 = vmatpush1.msra.mxu0 %v199
    %205 = vmatprep.subr.mxu0 0.0
    %206 = vmatpush1.msra.mxu0 %v200
    %207 = vmatprep.subr.mxu0 0.0
    %208 = vmatpush1.msra.mxu0 %v201
    %209 = vmatprep.subr.mxu0 0.0
    %210 = vmatpush1.msra.mxu0 %v202
    %211 = vmatprep.subr.mxu0 0.0
    %212 = vmatpush1.msra.mxu0 0.0
    %213 = vmatprep.subr.mxu0 0.0
    %214 = vmatpush1.msra.mxu0 0.0
    %215 = vmatprep.subr.mxu0 0.0
    %216 = vmatpush1.msra.mxu0 0.0
    %217 = vmatprep.subr.mxu0 0.0
    %218 = vmatpush1.msra.mxu0 0.0
    %219 = vmatprep.subr.mxu0 0.0
    %220 = vmatpush1.msra.mxu0 0.0
    %221 = vmatprep.subr.mxu0 0.0
    %222 = vmatpush1.msra.mxu0 0.0
    %223 = vmatprep.subr.mxu0 0.0
    %224 = vmatpush1.msra.mxu0 0.0
    %225 = vmatprep.subr.mxu0 0.0
    %226 = vmatpush1.msra.mxu0 0.0
    %227 = vmatprep.subr.mxu0 0.0
    %228 = vmatpush1.msra.mxu0 0.0
    %229 = vmatprep.subr.mxu0 0.0
    %230 = vmatpush1.msra.mxu0 0.0
    %231 = vmatprep.subr.mxu0 0.0
    %232 = vmatpush1.msra.mxu0 0.0
    %233 = vmatprep.subr.mxu0 0.0
    %234 = vmatpush1.msra.mxu0 0.0
    %235 = vmatprep.subr.mxu0 0.0
    %236 = vmatpush1.msra.mxu0 0.0
    %237 = vmatprep.subr.mxu0 0.0
    %238 = vmatpush1.msra.mxu0 0.0
    %239 = vmatprep.subr.mxu0 0.0
    %240 = vmatpush1.msra.mxu0 0.0
    %241 = vmatprep.subr.mxu0 0.0
    %242 = vmatpush1.msra.mxu0 0.0
    %243 = vmatprep.subr.mxu0 0.0
    %244 = vmatpush1.msra.mxu0 0.0
    %245 = vmatprep.subr.mxu0 0.0
    %246 = vmatpush1.msra.mxu0 0.0
    %247 = vmatprep.subr.mxu0 0.0
    %248 = vmatpush1.msra.mxu0 0.0
    %249 = vmatprep.subr.mxu0 0.0
    %250 = vmatpush1.msra.mxu0 0.0
    %251 = vmatprep.subr.mxu0 0.0
    %252 = vmatpush1.msra.mxu0 0.0
    %253 = vmatprep.subr.mxu0 0.0
    %254 = vmatpush1.msra.mxu0 0.0
    %255 = vmatprep.subr.mxu0 0.0
    %256 = vmatpush1.msra.mxu0 0.0
    %257 = vmatprep.subr.mxu0 0.0
    %258 = vmatpush1.msra.mxu0 0.0
    %259 = vmatprep.subr.mxu0 0.0
    %260 = vmatpush1.msra.mxu0 0.0
    %261 = vmatprep.subr.mxu0 0.0
    %262 = vmatpush1.msra.mxu0 0.0
    %263 = vmatprep.subr.mxu0 0.0
    %264 = vmatpush1.msra.mxu0 0.0
    %265 = vmatprep.subr.mxu0 0.0
    %266 = vmatpush1.msra.mxu0 0.0
    %267 = vmatprep.mubr.f32.mxu0 0.0
    %268 = vmatmul.mubr.f32.gmra.mrb[0].mxu0 %v119
    %v269 = vpop.f32.mrb[0].mxu0
    %v270 = vadd.f32 0.0, %v269
    %v271 = vpop.f32.mrb[0].mxu0
    %272 = vmatprep.mubr.f32.mxu0 0.0
    %273 = vmatmul.mubr.f32.gmra.mrb[0].mxu0 %v122
    %v274 = vpop.f32.mrb[0].mxu0
    %v275 = vadd.f32 0.0, %v274
    %v276 = vpop.f32.mrb[0].mxu0
    %277 = vdwg.mxu0
    %v278 = vxor.u32 %v191, 2147483648
    %v279 = vxor.u32 %v196, 2147483648
    %v280 = vmul.f32 %v278, 1.442695
    %v281 = vpow.pop %v280
    %v282 = vmul.f32 %v279, 1.442695
    %v283 = vpow.pop %v282
    %v284 = vadd.f32 %v281, 1.0
    %v285 = vadd.f32 %v283, 1.0
    %v286 = vrcp.pop %v284
    %v287 = vmul.f32 1.0, %v286
    %v288 = vrcp.pop %v285
    %v289 = vmul.f32 1.0, %v288
    %v290 = vmul.f32 %v191, %v287
    %v291 = vmul.f32 %v196, %v289
    %v292 = vmul.f32 %v290, %v270
    %v293 = vmul.f32 %v291, %v275
    %v294 = vld [vmem:[%s3] sm:$0xff]
    %v295 = vld [vmem:[%s3 + $0x8] sm:$0xff]
    %v296 = vld [vmem:[%s3 + $0x10] sm:$0xff]
    %v297 = vld [vmem:[%s3 + $0x18] sm:$0xff]
    %v298 = vld [vmem:[%s3 + $0x20] sm:$0xff]
    %v299 = vld [vmem:[%s3 + $0x28] sm:$0xff]
    %v300 = vld [vmem:[%s3 + $0x30] sm:$0xff]
    %v301 = vld [vmem:[%s3 + $0x38] sm:$0xff]
    %v302 = vld [vmem:[%s3 + $0x40] sm:$0xff]
    %v303 = vld [vmem:[%s3 + $0x48] sm:$0xff]
    %v304 = vld [vmem:[%s3 + $0x50] sm:$0xff]
    %v305 = vld [vmem:[%s3 + $0x58] sm:$0xff]
    %v306 = vld [vmem:[%s3 + $0x60] sm:$0xff]
    %v307 = vld [vmem:[%s3 + $0x68] sm:$0xff]
    %v308 = vld [vmem:[%s3 + $0x70] sm:$0xff]
    %v309 = vld [vmem:[%s3 + $0x78] sm:$0xff]
    %310 = vmatprep.subr.mxu0 0.0
    %311 = vmatpush1.msra.mxu0 %v294
    %312 = vmatprep.subr.mxu0 0.0
    %313 = vmatpush1.msra.mxu0 %v295
    %314 = vmatprep.subr.mxu0 0.0
    %315 = vmatpush1.msra.mxu0 %v296
    %316 = vmatprep.subr.mxu0 0.0
    %317 = vmatpush1.msra.mxu0 %v297
    %318 = vmatprep.subr.mxu0 0.0
    %319 = vmatpush1.msra.mxu0 %v298
    %320 = vmatprep.subr.mxu0 0.0
    %321 = vmatpush1.msra.mxu0 %v299
    %322 = vmatprep.subr.mxu0 0.0
    %323 = vmatpush1.msra.mxu0 %v300
    %324 = vmatprep.subr.mxu0 0.0
    %325 = vmatpush1.msra.mxu0 %v301
    %326 = vmatprep.subr.mxu0 0.0
    %327 = vmatpush1.msra.mxu0 %v302
    %328 = vmatprep.subr.mxu0 0.0
    %329 = vmatpush1.msra.mxu0 %v303
    %330 = vmatprep.subr.mxu0 0.0
    %331 = vmatpush1.msra.mxu0 %v304
    %332 = vmatprep.subr.mxu0 0.0
    %333 = vmatpush1.msra.mxu0 %v305
    %334 = vmatprep.subr.mxu0 0.0
    %335 = vmatpush1.msra.mxu0 %v306
    %336 = vmatprep.subr.mxu0 0.0
    %337 = vmatpush1.msra.mxu0 %v307
    %338 = vmatprep.subr.mxu0 0.0
    %339 = vmatpush1.msra.mxu0 %v308
    %340 = vmatprep.subr.mxu0 0.0
    %341 = vmatpush1.msra.mxu0 %v309
    %342 = vmatprep.subr.mxu0 0.0
    %343 = vmatpush1.msra.mxu0 0.0
    %344 = vmatprep.subr.mxu0 0.0
    %345 = vmatpush1.msra.mxu0 0.0
    %346 = vmatprep.subr.mxu0 0.0
    %347 = vmatpush1.msra.mxu0 0.0
    %348 = vmatprep.subr.mxu0 0.0
    %349 = vmatpush1.msra.mxu0 0.0
    %350 = vmatprep.subr.mxu0 0.0
    %351 = vmatpush1.msra.mxu0 0.0
    %352 = vmatprep.subr.mxu0 0.0
    %353 = vmatpush1.msra.mxu0 0.0
    %354 = vmatprep.subr.mxu0 0.0
    %355 = vmatpush1.msra.mxu0 0.0
    %356 = vmatprep.subr.mxu0 0.0
    %357 = vmatpush1.msra.mxu0 0.0
    %358 = vmatprep.subr.mxu0 0.0
    %359 = vmatpush1.msra.mxu0 0.0
    %360 = vmatprep.subr.mxu0 0.0
    %361 = vmatpush1.msra.mxu0 0.0
    %362 = vmatprep.subr.mxu0 0.0
    %363 = vmatpush1.msra.mxu0 0.0
    %364 = vmatprep.subr.mxu0 0.0
    %365 = vmatpush1.msra.mxu0 0.0
    %366 = vmatprep.subr.mxu0 0.0
    %367 = vmatpush1.msra.mxu0 0.0
    %368 = vmatprep.subr.mxu0 0.0
    %369 = vmatpush1.msra.mxu0 0.0
    %370 = vmatprep.subr.mxu0 0.0
    %371 = vmatpush1.msra.mxu0 0.0
    %372 = vmatprep.subr.mxu0 0.0
    %373 = vmatpush1.msra.mxu0 0.0
    %374 = vmatprep.mubr.f32.mxu0 0.0
    %375 = vmatmul.mubr.f32.gmra.mrb[0].mxu0 %v292
    %v376 = vpop.f32.mrb[0].mxu0
    %v377 = vadd.f32 0.0, %v376
    %v378 = vpop.f32.mrb[0].mxu0
    %379 = vmatprep.mubr.f32.mxu0 0.0
    %380 = vmatmul.mubr.f32.gmra.mrb[0].mxu0 %v293
    %v381 = vpop.f32.mrb[0].mxu0
    %v382 = vadd.f32 0.0, %v381
    %v383 = vpop.f32.mrb[0].mxu0
    %384 = vdwg.mxu0
    %385 = vst.msk [vmem:[#allocation4] sm:$0xff] %vm117, %v377
    %386 = vst.msk [vmem:[#allocation4 + $0x8] sm:$0xff] %vm117, %v382
    // Predicated region
    $region94: #{dense_mlp.1} parent=1 // pred_check
      _
    $region95: #{dense_mlp.1} parent=1 // pred_check_branch
      %388 = sbr.rel (0) target = $region97
    $region96: #{dense_mlp.1} parent=1 // pred_region
      %s390 = ssub.s32 256, 256
      %391 = vsyncadd [#allocation5], %s390
      %s392 = sshll.u32 [#allocation4], 4
      %s393 = int_to_ptr.vmem [resolvable:$true] %s392
      %398 = dma.vmem_to_hbm [thread:$0]  %s393, 256, %s4, [#allocation5], 128, 128, 8
    $region97: #{dense_mlp.1} parent=1 // pred_fallthru
      _
    // Predicated region
    $region98: #{dense_mlp.1} parent=1 // pred_check
      _
    $region99: #{dense_mlp.1} parent=1 // pred_check_branch
      %400 = sbr.rel (0) target = $region101
    $region100: #{dense_mlp.1} parent=1 // pred_region
      %401 = dma.done [#allocation5], 256
    $region101: #{dense_mlp.1} parent=1 // pred_fallthru
      _
    %402 = vsyncpa [#allocation5], 1

</llo_original>
